<compile_context>
chip_gen: v5e
topology: v5e:2x2
jax: 0.10.0
libtpu: 0.0.40
codegen_flags: <defaults>
</compile_context>

<pallas_src>
import jax
import jax.numpy as jnp
from jax import lax
from jax.experimental import pallas as pl
from jax.experimental.pallas import tpu as pltpu

TILE_S = 512  # lane-dense sample tile (multiple of 128)


def _metric_kernel(idx_ref, mprev_ref, params_ref, out_ref, acc_ref):
    # idx_ref:    VMEM (n_pad, 1)    int32   (pad rows hold -1 -> never match)
    # mprev_ref:  SMEM (1,)          float32
    # params_ref: VMEM (3, TILE_S)   float32 rows: A, B, C (zero-padded lanes)
    # out_ref:    SMEM (1, 1)        float32
    # acc_ref:    SMEM (1,)          float32 scratch accumulator
    s_tile = pl.program_id(0)
    n_pad = idx_ref.shape[0]
    ts = params_ref.shape[1]

    @pl.when(s_tile == 0)
    def _():
        acc_ref[0] = jnp.float32(0.0)

    # Global sample ids covered by this tile: base + lane.
    base = s_tile * ts
    lane = lax.broadcasted_iota(jnp.int32, (n_pad, ts), 1) + base   # (n_pad, ts)
    matches = idx_ref[...] == lane                                  # bcast (n_pad,1)->(n_pad,ts)
    # sel[0, s] = #occurrences of sample s in the index batch (handles dups).
    sel = jnp.sum(matches.astype(jnp.float32), axis=0, keepdims=True)  # (1, ts)

    p = params_ref[...]                                             # (3, ts)
    m_prev = mprev_ref[0]

    # Fused:  alpha*M + gamma*M + beta  ==  sum(((A + C)*M + B)[idx])
    combined = (p[0:1, :] + p[2:3, :]) * m_prev + p[1:2, :]         # (1, ts)
    acc_ref[0] += jnp.sum(combined * sel)

    @pl.when(s_tile == pl.num_programs(0) - 1)
    def _():
        out_ref[0, 0] = acc_ref[0]


def metric_simulator(A, B, C, c_t_indices, m_prev):
    """A, B, C: (num_samples,) f32; c_t_indices: (n,) int; m_prev: scalar f32."""
    S = A.shape[0]
    n = c_t_indices.shape[0]
    s_pad = ((S + TILE_S - 1) // TILE_S) * TILE_S    # lane-dense, tileable
    n_pad = max(8, ((n + 7) // 8) * 8)               # sublane-aligned index rows

    params = jnp.stack([A, B, C], axis=0).astype(jnp.float32)       # (3, S)
    if s_pad != S:
        params = jnp.pad(params, ((0, 0), (0, s_pad - S)))          # zero lanes

    idx = c_t_indices.astype(jnp.int32)
    if n_pad != n:
        idx = jnp.pad(idx, (0, n_pad - n), constant_values=-1)      # -1 never matches
    idx = idx.reshape(n_pad, 1)

    mprev = jnp.asarray(m_prev, jnp.float32).reshape((1,))

    grid = (s_pad // TILE_S,)
    out = pl.pallas_call(
        _metric_kernel,
        out_shape=jax.ShapeDtypeStruct((1, 1), jnp.float32),
        grid_spec=pltpu.PrefetchScalarGridSpec(
            num_scalar_prefetch=0,
            grid=grid,
            in_specs=[
                # Index column stays resident across all sample tiles.
                pl.BlockSpec((n_pad, 1), lambda s: (0, 0)),
                # Scalar M_prev lives in SMEM (untiled).
                pl.BlockSpec(memory_space=pltpu.MemorySpace.SMEM),
                # A/B/C rows, tiled along the lane (sample) axis.
                pl.BlockSpec((3, TILE_S), lambda s: (0, s)),
            ],
            # Scalar output in SMEM, untiled (written once on the last tile).
            out_specs=pl.BlockSpec(memory_space=pltpu.MemorySpace.SMEM),
            scratch_shapes=[pltpu.SMEM((1,), jnp.float32)],
        ),
        compiler_params=pltpu.CompilerParams(
            dimension_semantics=("arbitrary",)),
    )(idx, mprev, params)
    return out[0, 0]


if __name__ == "__main__":
    key = jax.random.PRNGKey(0)
    k_a, k_b, k_c, k_idx = jax.random.split(key, 4)

    num_samples = 64     # synthetic "dataset" size (A/B/C parameter length)
    num_indices = 8      # batch of sample ids per step

    A = jax.random.normal(k_a, (num_samples,), jnp.float32)
    B = jax.random.normal(k_b, (num_samples,), jnp.float32)
    C = jax.random.normal(k_c, (num_samples,), jnp.float32)

    c_t_indices = jax.random.randint(k_idx, (num_indices,), 0, num_samples)
    M_prev = jnp.float32(0.0)

    m_pred = metric_simulator(A, B, C, c_t_indices, M_prev)
    jax.block_until_ready(m_pred)

    # Pure-JAX reference check (same semantics as the PyTorch forward).
    alpha = A[c_t_indices].sum()
    beta = B[c_t_indices].sum()
    gamma = C[c_t_indices].sum()
    ref = alpha * M_prev + gamma * M_prev + beta
    assert jnp.allclose(m_pred, ref, atol=1e-5, rtol=1e-5), (m_pred, ref)

    print("KERNEL_OK")
</pallas_src>

<mosaic_0001>
module attributes {stable_mosaic.version = 11 : i64} {
  func.func @_metric_kernel(%arg0: i32, %arg1: memref<8x1xi32, #tpu.memory_space<vmem>>, %arg2: memref<1xf32, #tpu.memory_space<smem>>, %arg3: memref<3x512xf32, #tpu.memory_space<vmem>>, %arg4: memref<1x1xf32, #tpu.memory_space<smem>>, %arg5: memref<1xf32, #tpu.memory_space<smem>>) attributes {dimension_semantics = [#tpu.dimension_semantics<arbitrary>], iteration_bounds = array<i64: 1>, scalar_prefetch = 0 : i64, scratch_operands = 1 : i64, tpu.core_type = #tpu.core_type<tc>, window_params = [{pipeline_mode = #tpu.pipeline_mode<synchronous>, transform_indices = @transform_0, window_bounds = array<i64: 8, 1>}, {transform_indices = @transform_1, window_bounds = array<i64: 1>}, {transform_indices = @transform_2, window_bounds = array<i64: 3, 512>}, {transform_indices = @transform_3, window_bounds = array<i64: 1, 1>}]} {
    %c0_i32 = arith.constant 0 : i32
    %0 = arith.cmpi eq, %arg0, %c0_i32 : i32
    %1 = arith.extui %0 : i1 to i32
    %c0_i32_0 = arith.constant 0 : i32
    %2 = arith.cmpi ne, %1, %c0_i32_0 : i32
    scf.if %2 {
      %cst_10 = arith.constant 0.000000e+00 : f32
      %c0_11 = arith.constant 0 : index
      %34 = memref.load %arg5[%c0_11] : memref<1xf32, #tpu.memory_space<smem>>
      memref.store %cst_10, %arg5[%c0_11] : memref<1xf32, #tpu.memory_space<smem>>
    } else {
    }
    %c512_i32 = arith.constant 512 : i32
    %3 = arith.muli %arg0, %c512_i32 : i32
    %4 = tpu.iota {dimensions = array<i32: 1>} : vector<8x512xi32>
    %5 = vector.broadcast %3 : i32 to vector<8x512xi32>
    %6 = arith.addi %4, %5 : vector<8x512xi32>
    %c0 = arith.constant 0 : index
    %c0_1 = arith.constant 0 : index
    %7 = vector.load %arg1[%c0, %c0_1] : memref<8x1xi32, #tpu.memory_space<vmem>>, vector<8x1xi32>
    %8 = vector.broadcast %7 : vector<8x1xi32> to vector<8x512xi32>
    %9 = arith.cmpi eq, %8, %6 : vector<8x512xi32>
    %10 = arith.extui %9 : vector<8x512xi1> to vector<8x512xi32>
    %11 = arith.sitofp %10 : vector<8x512xi32> to vector<8x512xf32>
    %cst = arith.constant dense<0.000000e+00> : vector<512xf32>
    %12 = vector.multi_reduction <add>, %11, %cst [0] : vector<8x512xf32> to vector<512xf32>
    %13 = vector.shape_cast %12 : vector<512xf32> to vector<1x512xf32>
    %c0_2 = arith.constant 0 : index
    %c0_3 = arith.constant 0 : index
    %14 = vector.load %arg3[%c0_2, %c0_3] : memref<3x512xf32, #tpu.memory_space<vmem>>, vector<3x512xf32>
    %c0_4 = arith.constant 0 : index
    %15 = memref.load %arg2[%c0_4] : memref<1xf32, #tpu.memory_space<smem>>
    %16 = vector.extract_strided_slice %14 {offsets = [0, 0], sizes = [1, 512], strides = [1, 1]} : vector<3x512xf32> to vector<1x512xf32>
    %17 = vector.extract_strided_slice %14 {offsets = [2, 0], sizes = [1, 512], strides = [1, 1]} : vector<3x512xf32> to vector<1x512xf32>
    %18 = arith.addf %16, %17 : vector<1x512xf32>
    %19 = vector.broadcast %15 : f32 to vector<1x512xf32>
    %20 = arith.mulf %18, %19 : vector<1x512xf32>
    %21 = vector.extract_strided_slice %14 {offsets = [1, 0], sizes = [1, 512], strides = [1, 1]} : vector<3x512xf32> to vector<1x512xf32>
    %22 = arith.addf %20, %21 : vector<1x512xf32>
    %c0_5 = arith.constant 0 : index
    %23 = memref.load %arg5[%c0_5] : memref<1xf32, #tpu.memory_space<smem>>
    %24 = arith.mulf %22, %13 : vector<1x512xf32>
    %25 = vector.shape_cast %24 : vector<1x512xf32> to vector<1x1x512xf32>
    %cst_6 = arith.constant dense<0.000000e+00> : vector<1xf32>
    %26 = vector.multi_reduction <add>, %25, %cst_6 [1, 2] : vector<1x1x512xf32> to vector<1xf32>
    %27 = vector.shape_cast %26 : vector<1xf32> to vector<1x1x1xf32>
    %28 = vector.extract %27[0, 0, 0] : f32 from vector<1x1x1xf32>
    %29 = arith.addf %23, %28 : f32
    %c0_7 = arith.constant 0 : index
    %30 = memref.load %arg5[%c0_7] : memref<1xf32, #tpu.memory_space<smem>>
    memref.store %29, %arg5[%c0_7] : memref<1xf32, #tpu.memory_space<smem>>
    %c0_i32_8 = arith.constant 0 : i32
    %31 = arith.cmpi eq, %arg0, %c0_i32_8 : i32
    %32 = arith.extui %31 : i1 to i32
    %c0_i32_9 = arith.constant 0 : i32
    %33 = arith.cmpi ne, %32, %c0_i32_9 : i32
    scf.if %33 {
      %c0_10 = arith.constant 0 : index
      %34 = memref.load %arg5[%c0_10] : memref<1xf32, #tpu.memory_space<smem>>
      %c0_11 = arith.constant 0 : index
      %c0_12 = arith.constant 0 : index
      %35 = memref.load %arg4[%c0_11, %c0_12] : memref<1x1xf32, #tpu.memory_space<smem>>
      memref.store %34, %arg4[%c0_11, %c0_12] : memref<1x1xf32, #tpu.memory_space<smem>>
    } else {
    }
    return
  }
  func.func @transform_0(%arg0: i32) -> (i32, i32) {
    %c0_i32 = arith.constant 0 : i32
    %c0_i32_0 = arith.constant 0 : i32
    %c0_i32_1 = arith.constant 0 : i32
    return %c0_i32, %c0_i32_0 : i32, i32
  }
  func.func @transform_1(%arg0: i32) -> i32 {
    %c0_i32 = arith.constant 0 : i32
    %c0_i32_0 = arith.constant 0 : i32
    return %c0_i32 : i32
  }
  func.func @transform_2(%arg0: i32) -> (i32, i32) {
    %c0_i32 = arith.constant 0 : i32
    %c0_i32_0 = arith.constant 0 : i32
    return %c0_i32, %arg0 : i32, i32
  }
  func.func @transform_3(%arg0: i32) -> (i32, i32) {
    %c0_i32 = arith.constant 0 : i32
    %c0_i32_0 = arith.constant 0 : i32
    %c0_i32_1 = arith.constant 0 : i32
    return %c0_i32, %c0_i32_0 : i32, i32
  }
}

</mosaic_0001>

<llo_original>
// kernel: tpu_custom_call.1
$region0: #{tpu_custom_call.1}
  #allocation0 [shape = 'u32[]', space=smem, size = 0x4, offset = 0x4, fixed_abs, tag = 'smem constant byte address 0x4 - core index']
  #allocation1 [shape = 'u32[72,128]{1,0:T(1,128)}', space=vmem, size = 0x9000, scoped, tag = 'internal scratch']
  #allocation2 [shape = 'f32[1]{0:T(128)}', space=smem, size = 0x200, scoped, tag = 'scratch operand']
  #allocation3 [shape = 'f32[1]{0:T(128)S(6)}', space=smem, size = 0x200, scoped, tag = 'scoped memory for tpu_custom_call.1']
  %s0 = inlined_call_operand.vmem [shape: s32[8,1], index: 0, kind: input, shape index: {}]
  %s1 = inlined_call_operand.<no memory space> [shape: f32[1], index: 1, kind: input, shape index: {}]
  %s2 = inlined_call_operand.hbm [shape: f32[3,512], index: 2, kind: input, shape index: {}]
  %s3 = inlined_call_operand.hbm [shape: f32[1,1], index: 3, kind: output, shape index: {}]
  %s4 = sld [smem:[#allocation0]]
  $region34: #{tpu_custom_call.1} parent=0
    _
  %s6 = ssub.s32 1, %s4
  %s7 = scalar_select 0, %s6, %s4
  %8 = sst [smem:[#allocation3]] %s1
  $region1: #{tpu_custom_call.1} parent=0
    #allocation4 [shape = 'u8[8192]{0}', space=vmem, size = 0x2000, scoped, tag = 'input window, operand 2, single buffered']
    #allocation5 [shape = 's32[1]{0}', space=sflag, size = 0x4, scoped, tag = 'scoped memory for tpu_custom_call.1']
    #allocation6 [shape = 's32[1]{0}', space=sflag, size = 0x4, scoped, tag = 'scoped memory for tpu_custom_call.1']
    #allocation7 [shape = 'u8[512]{0}', space=smem, size = 0x200, scoped, tag = 'output window, operand 0, single buffered']
    %9 = vsyncpa [#allocation5], 0
    %10 = vsyncpa [#allocation6], 0
    // Predicated region
    $region2: #{tpu_custom_call.1} parent=1 // pred_check
      _
    $region3: #{tpu_custom_call.1} parent=1 // pred_check_branch
      %12 = sbr.rel (0) target = $region5
    $region4: #{tpu_custom_call.1} parent=1 // pred_region
      _
    $region5: #{tpu_custom_call.1} parent=1 // pred_fallthru
      _
    // Predicated region
    $region6: #{tpu_custom_call.1} parent=1 // pred_check
      _
    $region7: #{tpu_custom_call.1} parent=1 // pred_check_branch
      %14 = sbr.rel (0) target = $region9
    $region8: #{tpu_custom_call.1} parent=1 // pred_region
      _
    $region9: #{tpu_custom_call.1} parent=1 // pred_fallthru
      _
    // Predicated region
    $region10: #{tpu_custom_call.1} parent=1 // pred_check
      _
    $region11: #{tpu_custom_call.1} parent=1 // pred_check_branch
      %16 = sbr.rel (0) target = $region13
    $region12: #{tpu_custom_call.1} parent=1 // pred_region
      %18 = vsyncadd [#allocation5], 0
      %s20 = sshll.u32 %s2, 4
      %s21 = int_to_ptr.hbm [resolvable:$true] %s20
      %s22 = sshll.u32 [#allocation4], 4
      %s23 = int_to_ptr.vmem [resolvable:$true] %s22
      %25 = dma.hbm_to_vmem [thread:$0]  %s21, 256, %s23, [#allocation5]
    $region13: #{tpu_custom_call.1} parent=1 // pred_fallthru
      _
    // Predicated region
    $region14: #{tpu_custom_call.1} parent=1 // pred_check
      _
    $region15: #{tpu_custom_call.1} parent=1 // pred_check_branch
      %27 = sbr.rel (0) target = $region17
    $region16: #{tpu_custom_call.1} parent=1 // pred_region
      %29 = dma.done [#allocation5], 256
    $region17: #{tpu_custom_call.1} parent=1 // pred_fallthru
      _
    %p30 = scmp.eq.s32.totalorder 0, 0
    // Predicated region
    $region18: #{tpu_custom_call.1} parent=1 // pred_check
      %p31 = pneg %p30
    $region19: #{tpu_custom_call.1} parent=1 // pred_check_branch
      %33 = sbr.rel (%p31) target = $region21
    $region20: #{tpu_custom_call.1} parent=1 // pred_region
      %s34 = scalar_lea.smem [#allocation2], 0
      %35 = sst [smem:[%s34]] 0.0
    $region21: #{tpu_custom_call.1} parent=1 // pred_fallthru
      _
    %s36 = smul.u32 0, 512
    %v37 = vlaneseq
    %v38 = vand.u32 %v37, 127
    %v39 = vadd.s32 %v38, 128
    %v40 = vadd.s32 %v38, 256
    %v41 = vadd.s32 %v38, 384
    %v42 = vstv %s36
    %v43 = vadd.s32 %v38, %v42
    %v44 = vadd.s32 %v39, %v42
    %v45 = vadd.s32 %v40, %v42
    %v46 = vadd.s32 %v41, %v42
    %v47 = vld [vmem:[%s0] sm:$0xff]
    %48 = vset.pattern.permute.xlu0 0
    %49 = vperm.xlu0 %48, %v47
    %v50 = vpop.permute.xlu0 %49
    %vm51 = vcmp.eq.s32.totalorder %v50, %v43
    %vm52 = vcmp.eq.s32.totalorder %v50, %v44
    %vm53 = vcmp.eq.s32.totalorder %v50, %v45
    %vm54 = vcmp.eq.s32.totalorder %v50, %v46
    %v55 = vsel %vm51, 1, 0
    %v56 = vsel %vm52, 1, 0
    %v57 = vsel %vm53, 1, 0
    %v58 = vsel %vm54, 1, 0
    %v59 = vcvt.s32.f32 %v55
    %v60 = vcvt.s32.f32 %v56
    %v61 = vcvt.s32.f32 %v57
    %v62 = vcvt.s32.f32 %v58
    %v63 = vrot.slane %v59, 4
    %v64 = vadd.f32 %v59, %v63
    %v65 = vrot.slane %v64, 2
    %v66 = vadd.f32 %v64, %v65
    %v67 = vrot.slane %v66, 1
    %v68 = vadd.f32 %v66, %v67
    %v69 = vrot.slane %v60, 4
    %v70 = vadd.f32 %v60, %v69
    %v71 = vrot.slane %v70, 2
    %v72 = vadd.f32 %v70, %v71
    %v73 = vrot.slane %v72, 1
    %v74 = vadd.f32 %v72, %v73
    %v75 = vrot.slane %v61, 4
    %v76 = vadd.f32 %v61, %v75
    %v77 = vrot.slane %v76, 2
    %v78 = vadd.f32 %v76, %v77
    %v79 = vrot.slane %v78, 1
    %v80 = vadd.f32 %v78, %v79
    %v81 = vrot.slane %v62, 4
    %v82 = vadd.f32 %v62, %v81
    %v83 = vrot.slane %v82, 2
    %v84 = vadd.f32 %v82, %v83
    %v85 = vrot.slane %v84, 1
    %v86 = vadd.f32 %v84, %v85
    %v87 = vld [vmem:[#allocation4] sm:$0x77]
    %v88 = vld [vmem:[#allocation4 + $0x8] sm:$0x77]
    %s89 = sld [smem:[#allocation3]]
    %v92 = vrot.slane %v87, 6
    %v93 = vrot.slane %v92, 4
    %v94 = vrot.slane %v88, 6
    %v95 = vrot.slane %v94, 4
    %v98 = vadd.f32 %v87, %v93
    %v99 = vadd.f32 %v88, %v95
    %v100 = vstv %s89
    %v101 = vmul.f32 %v98, %v100
    %v102 = vmul.f32 %v99, %v100
    %v103 = vrot.slane %v87, 5
    %v104 = vrot.slane %v103, 4
    %v105 = vrot.slane %v88, 5
    %v106 = vrot.slane %v105, 4
    %v109 = vadd.f32 %v101, %v104
    %v110 = vadd.f32 %v102, %v106
    %s111 = sld [smem:[#allocation2]]
    %v116 = vrot.slane %v74, 4
    %v117 = vrot.slane %v86, 4
    %vm118 = vcmask 1043456
    %v119 = vsel %vm118, %v68, %v116
    %v120 = vsel %vm118, %v80, %v117
    %v123 = vmul.f32 %v109, %v119
    %v124 = vmul.f32 %v110, %v120
    %v127 = vperm.slane %v123, 0
    %v128 = vperm.slane %v123, 4
    %v129 = vperm.slane %v124, 0
    %v130 = vperm.slane %v124, 4
    %vm135 = vcmask 1040384
    %v136 = vsel %vm135, %v127, 0.0
    %v137 = vsel %vm135, %v128, 0.0
    %v138 = vadd.f32 %v136, %v137
    %v139 = vsel %vm135, %v129, 0.0
    %v140 = vadd.f32 %v138, %v139
    %v141 = vsel %vm135, %v130, 0.0
    %v142 = vadd.f32 %v140, %v141
    %143 = vadd.xlane.f32.xlu0 %v142
    %v144 = vpop.xlane.xlu0 %143
    %v145 = vrot.slane %v144, 4
    %v146 = vadd.f32 %v144, %v145
    %v147 = vrot.slane %v146, 2
    %v148 = vadd.f32 %v146, %v147
    %v149 = vrot.slane %v148, 1
    %v150 = vadd.f32 %v148, %v149
    %s151 = vtos %v150
    %s152 = sadd.f32 %s111, %s151
    %s153 = scalar_lea.smem [#allocation2], 0
    %154 = sst [smem:[%s153]] %s152
    // Predicated region
    $region22: #{tpu_custom_call.1} parent=1 // pred_check
      %p155 = pneg %p30
    $region23: #{tpu_custom_call.1} parent=1 // pred_check_branch
      %157 = sbr.rel (%p155) target = $region25
    $region24: #{tpu_custom_call.1} parent=1 // pred_region
      %s158 = sld [smem:[#allocation2]]
      %s159 = scalar_lea.smem [#allocation7], 0
      %160 = sst [smem:[%s159]] %s158
    $region25: #{tpu_custom_call.1} parent=1 // pred_fallthru
      _
    // Predicated region
    $region26: #{tpu_custom_call.1} parent=1 // pred_check
      _
    $region27: #{tpu_custom_call.1} parent=1 // pred_check_branch
      %162 = sbr.rel (0) target = $region29
    $region28: #{tpu_custom_call.1} parent=1 // pred_region
      %164 = vsyncadd [#allocation6], 0
      %s166 = sshll.u32 %s3, 4
      %s167 = int_to_ptr.hbm [resolvable:$true] %s166
      %169 = dma.smem_to_hbm [#allocation7], 16, %s167, [#allocation6]
    $region29: #{tpu_custom_call.1} parent=1 // pred_fallthru
      _
    // Predicated region
    $region30: #{tpu_custom_call.1} parent=1 // pred_check
      _
    $region31: #{tpu_custom_call.1} parent=1 // pred_check_branch
      %171 = sbr.rel (0) target = $region33
    $region32: #{tpu_custom_call.1} parent=1 // pred_region
      %173 = dma.done [#allocation6], 16
    $region33: #{tpu_custom_call.1} parent=1 // pred_fallthru
      _
    %174 = sfence
    %175 = vsyncpa [#allocation5], 1
    %176 = vsyncpa [#allocation6], 1

</llo_original>
